<compile_context>
chip_gen: v5e
topology: v5e:2x2
jax: 0.10.0
libtpu: 0.0.40
codegen_flags: <defaults>
</compile_context>

<pallas_src>
import functools

import jax
import jax.numpy as jnp
import numpy as np
from jax.experimental import pallas as pl
from jax.experimental.pallas import tpu as pltpu


def _nin_block_kernel(w_ref, b_ref, x_ref, r_ref, o_ref, *, nb, mm_dtype):
    """One (batch-block, spatial-tile) step of NINBlock.

    w_ref : (Cout, 2C)     weight-normed conv weight                [mm_dtype]
    b_ref : (Cout, 1)      bias                                     [f32]
    x_ref : (Nb, C, THW)   skip-connection input tile               [io dtype]
    r_ref : (Nb, C, THW)   residual-branch input tile               [io dtype]
    o_ref : (Nb, Cout, THW) output tile                             [io dtype]
    """
    w = w_ref[...]                    # (Cout, 2C), resident in VMEM
    b = b_ref[...]                    # (Cout, 1), f32

    # Small static unrolled loop over the batch elements in this block.
    for i in range(nb):
        r = r_ref[i].astype(jnp.float32)                 # (C, THW), f32 VPU math

        # concat_elu with exactly one EUP transcendental (alpha = 1):
        #   e      = exp(-|r|) - 1   (argument <= 0: never overflows)
        #   elu(r) = r  if r > 0 else e
        #   elu(-r)= e  if r > 0 else -r
        e = jnp.exp(-jnp.abs(r)) - 1.0
        pos = r > 0
        a_pos = jnp.where(pos, r, e)
        a_neg = jnp.where(pos, e, -r)

        # Fused K = 2C matmul (one MXU push stream instead of two).
        a = jnp.concatenate([a_pos, a_neg], axis=0).astype(mm_dtype)   # (2C, THW)
        acc = jnp.dot(w, a, preferred_element_type=jnp.float32)        # (Cout, THW)

        o_ref[i] = (acc + b + x_ref[i].astype(jnp.float32)).astype(o_ref.dtype)


def _vmem_bytes(nb, thw, c, cout, io_bytes):
    """Conservative per-step VMEM working-set estimate (bytes)."""
    dma = 2 * (2 * nb * c * thw + nb * cout * thw) * io_bytes  # double-buffered x,r,out
    temps = 8 * c * thw * 4                                    # in-kernel f32 temporaries
    weights = cout * 2 * c * 4 + cout * 4
    return dma + temps + weights


def _plan_tiles(n, c, cout, hw_padded, io_bytes, target_tile_bytes, vmem_cap_bytes):
    """Pick (thw, nb): spatial tile width and batch block size."""
    def fits(nb, thw):
        return _vmem_bytes(nb, thw, c, cout, io_bytes) <= vmem_cap_bytes

    # Spatial tile: largest multiple-of-128 divisor of the padded H*W that fits
    # the VMEM budget (hw_padded is always a multiple of 128).
    divisors = [d for d in range(128, hw_padded + 1, 128) if hw_padded % d == 0]
    thw = divisors[0]
    for d in divisors:
        if fits(1, d):
            thw = d

    # Guarantee >= 2 grid steps when the problem allows it, so both v7x
    # TensorCores get work (no effect on single-TC v5e/v6e).
    if n * (hw_padded // thw) < 2:
        smaller = [d for d in divisors if d < thw]
        if smaller:
            thw = smaller[-1]

    # Batch blocking: grow the per-step DMA toward the target size without
    # blowing the VMEM budget and without collapsing the grid below 2 steps.
    nb = 1
    for d in range(1, n + 1):
        if n % d:
            continue
        if not fits(d, thw):
            break
        steps = (n // d) * (hw_padded // thw)
        if steps < 2 and n * (hw_padded // thw) >= 2:
            break
        nb = d
        if d * c * thw * io_bytes >= target_tile_bytes:
            break
    return thw, nb


def nin_block_forward(x, residual, v, g, bias, *,
                      target_tile_bytes=512 * 1024,
                      vmem_cap_bytes=48 << 20):
    """NINBlock forward: x + Conv1x1_weightnorm(concat_elu(residual)).

    x        : (N, C, H, W)   f32 or bf16 (bf16 halves HBM traffic)
    residual : (N, C, H, W)   same dtype as x
    v        : (C, 2C, 1, 1)  weight_norm direction (PyTorch layout: out, in, kh, kw)
    g        : (C, 1, 1, 1)   weight_norm magnitude (dim=0)
    bias     : (C,)
    returns  : (N, C, H, W)   in x.dtype
    """
    N, C, H, W = x.shape
    Cout, Cin = v.shape[0], v.shape[1]
    assert Cin == 2 * C and Cout == C, (v.shape, x.shape)
    HW = H * W
    io_bytes = jnp.dtype(x.dtype).itemsize

    # Matmul operand dtype: bf16 only if the data already arrives as bf16;
    # otherwise keep full f32 (kernel is HBM-bound, the f32 MXU passes are free).
    mm_dtype = jnp.bfloat16 if x.dtype == jnp.bfloat16 else jnp.float32

    # ---- weight norm (nn.utils.weight_norm, dim=0 over (Cout, Cin, 1, 1)), f32.
    v2 = v.reshape(Cout, Cin).astype(jnp.float32)
    w = (g.reshape(Cout, 1).astype(jnp.float32) * v2
         / jnp.sqrt(jnp.sum(v2 * v2, axis=1, keepdims=True)))        # (Cout, 2C)
    w = w.astype(mm_dtype)
    b2 = bias.reshape(Cout, 1).astype(jnp.float32)

    # ---- NCHW kept as-is; (N, C, H, W) -> (N, C, H*W) is a free view.
    x3 = x.reshape(N, C, HW)
    r3 = residual.reshape(N, C, HW)

    # Pad the spatial axis to a multiple of 128 so every tile / store is
    # lane-dense (unmasked vst) and VMEM budgeting is exact.
    HWp = pl.cdiv(HW, 128) * 128
    if HWp != HW:
        pad = HWp - HW
        x3 = jnp.pad(x3, ((0, 0), (0, 0), (0, pad)))
        r3 = jnp.pad(r3, ((0, 0), (0, 0), (0, pad)))

    thw, nb = _plan_tiles(N, C, Cout, HWp, io_bytes,
                          target_tile_bytes, vmem_cap_bytes)
    grid = (N // nb, HWp // thw)

    est = _vmem_bytes(nb, thw, C, Cout, io_bytes)
    vmem_limit = int(min(vmem_cap_bytes, max(est + (4 << 20), 32 << 20)))

    w_spec = pl.BlockSpec((Cout, 2 * C), lambda n, j: (0, 0))   # resident in VMEM
    b_spec = pl.BlockSpec((Cout, 1), lambda n, j: (0, 0))
    in_spec = pl.BlockSpec((nb, C, thw), lambda n, j: (n, 0, j))
    out_spec = pl.BlockSpec((nb, Cout, thw), lambda n, j: (n, 0, j))

    kernel = functools.partial(_nin_block_kernel, nb=nb, mm_dtype=mm_dtype)

    out = pl.pallas_call(
        kernel,
        out_shape=jax.ShapeDtypeStruct((N, Cout, HWp), x.dtype),
        grid_spec=pltpu.PrefetchScalarGridSpec(
            num_scalar_prefetch=0,
            grid=grid,
            in_specs=[w_spec, b_spec, in_spec, in_spec],
            out_specs=out_spec,
        ),
        compiler_params=pltpu.CompilerParams(
            dimension_semantics=("parallel", "parallel"),
            vmem_limit_bytes=vmem_limit),
    )(w, b2, x3, r3)

    if HWp != HW:
        out = out[:, :, :HW]
    return out.reshape(N, Cout, H, W)


def _reference_nin_block(x, residual, v, g, bias):
    """Pure-JAX (f32) reference of NINBlock.forward with concat_elu activation."""
    Cout, Cin = v.shape[0], v.shape[1]
    v2 = v.reshape(Cout, Cin).astype(jnp.float32)
    w = (g.reshape(Cout, 1).astype(jnp.float32) * v2
         / jnp.sqrt(jnp.sum(v2 * v2, axis=1, keepdims=True)))
    r = residual.astype(jnp.float32)
    a = jnp.concatenate([r, -r], axis=1)                           # (N, 2C, H, W)
    a = jnp.where(a > 0, a, jnp.exp(a) - 1.0)                      # ELU, alpha=1
    out = jnp.einsum('dc,nchw->ndhw', w, a) + bias.reshape(1, Cout, 1, 1).astype(jnp.float32)
    return x.astype(jnp.float32) + out


if __name__ == "__main__":
    num_filters = 32
    N, H, W = 2, 16, 16

    key = jax.random.PRNGKey(0)
    kx, kr, kv, kg, kb = jax.random.split(key, 5)
    x = jax.random.normal(kx, (N, num_filters, H, W), dtype=jnp.float32)
    residual = jax.random.normal(kr, (N, num_filters, H, W), dtype=jnp.float32)
    v = jax.random.normal(kv, (num_filters, 2 * num_filters, 1, 1),
                          dtype=jnp.float32) * 0.05
    g = jax.random.uniform(kg, (num_filters, 1, 1, 1), dtype=jnp.float32,
                           minval=0.5, maxval=1.5)
    bias = jax.random.normal(kb, (num_filters,), dtype=jnp.float32) * 0.1

    # --- f32 I/O path (f32 weights + f32 MXU matmul, f32 accumulation).
    # Tolerance leaves slack for platform-default MXU matmul-precision choices;
    # on an accurate-f32 MXU path the observed error is ~1e-6.
    y = jax.block_until_ready(nin_block_forward(x, residual, v, g, bias))
    assert y.shape == (N, num_filters, H, W), y.shape
    y_ref = jax.block_until_ready(_reference_nin_block(x, residual, v, g, bias))
    np.testing.assert_allclose(np.asarray(y), np.asarray(y_ref),
                               rtol=2e-2, atol=2e-2)

    # --- bf16 I/O path: the main perf lever (halves HBM bytes); looser tolerance.
    xb = x.astype(jnp.bfloat16)
    rb = residual.astype(jnp.bfloat16)
    yb = jax.block_until_ready(nin_block_forward(xb, rb, v, g, bias))
    yb_ref = _reference_nin_block(xb.astype(jnp.float32), rb.astype(jnp.float32),
                                  v, g, bias)
    np.testing.assert_allclose(np.asarray(yb, dtype=np.float32), np.asarray(yb_ref),
                               rtol=6e-2, atol=6e-2)

    # --- non-multiple-of-128 spatial size exercises the padding / lane-dense path.
    Ho, Wo = 10, 10
    xo = jax.random.normal(kx, (1, num_filters, Ho, Wo), dtype=jnp.float32)
    ro = jax.random.normal(kr, (1, num_filters, Ho, Wo), dtype=jnp.float32)
    yo = jax.block_until_ready(nin_block_forward(xo, ro, v, g, bias))
    yo_ref = _reference_nin_block(xo, ro, v, g, bias)
    np.testing.assert_allclose(np.asarray(yo), np.asarray(yo_ref),
                               rtol=2e-2, atol=2e-2)

    print("KERNEL_OK")
</pallas_src>

<mosaic_0001>
module attributes {stable_mosaic.version = 11 : i64} {
  func.func @_nin_block_kernel(%arg0: i32, %arg1: i32, %arg2: memref<32x64xf32, #tpu.memory_space<vmem>>, %arg3: memref<32x1xf32, #tpu.memory_space<vmem>>, %arg4: memref<1x32x256xf32, #tpu.memory_space<vmem>>, %arg5: memref<1x32x256xf32, #tpu.memory_space<vmem>>, %arg6: memref<1x32x256xf32, #tpu.memory_space<vmem>>) attributes {dimension_semantics = [#tpu.dimension_semantics<parallel>, #tpu.dimension_semantics<parallel>], iteration_bounds = array<i64: 2, 1>, scalar_prefetch = 0 : i64, scratch_operands = 0 : i64, tpu.core_type = #tpu.core_type<tc>, window_params = [{pipeline_mode = #tpu.pipeline_mode<synchronous>, transform_indices = @transform_0, window_bounds = array<i64: 32, 64>}, {pipeline_mode = #tpu.pipeline_mode<synchronous>, transform_indices = @transform_1, window_bounds = array<i64: 32, 1>}, {transform_indices = @transform_2, window_bounds = array<i64: 1, 32, 256>}, {transform_indices = @transform_3, window_bounds = array<i64: 1, 32, 256>}, {transform_indices = @transform_4, window_bounds = array<i64: 1, 32, 256>}]} {
    %c0 = arith.constant 0 : index
    %c0_0 = arith.constant 0 : index
    %0 = vector.load %arg2[%c0, %c0_0] : memref<32x64xf32, #tpu.memory_space<vmem>>, vector<32x64xf32>
    %c0_1 = arith.constant 0 : index
    %c0_2 = arith.constant 0 : index
    %1 = vector.load %arg3[%c0_1, %c0_2] : memref<32x1xf32, #tpu.memory_space<vmem>>, vector<32x1xf32>
    %c0_3 = arith.constant 0 : index
    %c0_4 = arith.constant 0 : index
    %c0_5 = arith.constant 0 : index
    %2 = vector.load %arg5[%c0_3, %c0_4, %c0_5] : memref<1x32x256xf32, #tpu.memory_space<vmem>>, vector<1x32x256xf32>
    %3 = vector.shape_cast %2 : vector<1x32x256xf32> to vector<32x256xf32>
    %4 = math.absf %3 : vector<32x256xf32>
    %cst = arith.constant 0.000000e+00 : f32
    %5 = vector.broadcast %cst : f32 to vector<32x256xf32>
    %6 = arith.subf %5, %4 : vector<32x256xf32>
    %7 = math.exp %6 : vector<32x256xf32>
    %cst_6 = arith.constant 1.000000e+00 : f32
    %8 = vector.broadcast %cst_6 : f32 to vector<32x256xf32>
    %9 = arith.subf %7, %8 : vector<32x256xf32>
    %cst_7 = arith.constant 0.000000e+00 : f32
    %10 = vector.broadcast %cst_7 : f32 to vector<32x256xf32>
    %11 = arith.cmpf ogt, %3, %10 : vector<32x256xf32>
    %12 = arith.select %11, %3, %9 : vector<32x256xi1>, vector<32x256xf32>
    %cst_8 = arith.constant 0.000000e+00 : f32
    %13 = vector.broadcast %cst_8 : f32 to vector<32x256xf32>
    %14 = arith.subf %13, %3 : vector<32x256xf32>
    %15 = arith.select %11, %9, %14 : vector<32x256xi1>, vector<32x256xf32>
    %16 = tpu.concatenate %12, %15 in 0 : vector<32x256xf32>, vector<32x256xf32> -> vector<64x256xf32>
    %cst_9 = arith.constant dense<0.000000e+00> : vector<32x256xf32>
    %17 = tpu.matmul %0, %16, %cst_9 {dimension_numbers = #tpu.dot_dimension_numbers<[1], [0], [0], [1], [0, 0, 1, 1], [], []>} : vector<32x64xf32>, vector<64x256xf32>, vector<32x256xf32> -> vector<32x256xf32>
    %18 = vector.broadcast %1 : vector<32x1xf32> to vector<32x256xf32>
    %19 = arith.addf %17, %18 : vector<32x256xf32>
    %c0_10 = arith.constant 0 : index
    %c0_11 = arith.constant 0 : index
    %c0_12 = arith.constant 0 : index
    %20 = vector.load %arg4[%c0_10, %c0_11, %c0_12] : memref<1x32x256xf32, #tpu.memory_space<vmem>>, vector<1x32x256xf32>
    %21 = vector.shape_cast %20 : vector<1x32x256xf32> to vector<32x256xf32>
    %22 = arith.addf %19, %21 : vector<32x256xf32>
    %c0_13 = arith.constant 0 : index
    %c0_14 = arith.constant 0 : index
    %c0_15 = arith.constant 0 : index
    %23 = vector.load %arg6[%c0_13, %c0_14, %c0_15] : memref<1x32x256xf32, #tpu.memory_space<vmem>>, vector<1x32x256xf32>
    %24 = vector.shape_cast %23 : vector<1x32x256xf32> to vector<32x256xf32>
    %25 = vector.shape_cast %22 : vector<32x256xf32> to vector<1x32x256xf32>
    tpu.vector_store %arg6[%c0_13, %c0_14, %c0_15], %25 {strides = array<i32>} : memref<1x32x256xf32, #tpu.memory_space<vmem>>, vector<1x32x256xf32>,
    return
  }
  func.func @transform_0(%arg0: i32, %arg1: i32) -> (i32, i32) {
    %c0_i32 = arith.constant 0 : i32
    %c0_i32_0 = arith.constant 0 : i32
    %c0_i32_1 = arith.constant 0 : i32
    return %c0_i32, %c0_i32_0 : i32, i32
  }
  func.func @transform_1(%arg0: i32, %arg1: i32) -> (i32, i32) {
    %c0_i32 = arith.constant 0 : i32
    %c0_i32_0 = arith.constant 0 : i32
    %c0_i32_1 = arith.constant 0 : i32
    return %c0_i32, %c0_i32_0 : i32, i32
  }
  func.func @transform_2(%arg0: i32, %arg1: i32) -> (i32, i32, i32) {
    %c0_i32 = arith.constant 0 : i32
    %c0_i32_0 = arith.constant 0 : i32
    return %arg0, %c0_i32, %arg1 : i32, i32, i32
  }
  func.func @transform_3(%arg0: i32, %arg1: i32) -> (i32, i32, i32) {
    %c0_i32 = arith.constant 0 : i32
    %c0_i32_0 = arith.constant 0 : i32
    return %arg0, %c0_i32, %arg1 : i32, i32, i32
  }
  func.func @transform_4(%arg0: i32, %arg1: i32) -> (i32, i32, i32) {
    %c0_i32 = arith.constant 0 : i32
    %c0_i32_0 = arith.constant 0 : i32
    return %arg0, %c0_i32, %arg1 : i32, i32, i32
  }
}

</mosaic_0001>

<llo_original>
// kernel: tpu_custom_call.1
$region0: #{tpu_custom_call.1}
  #allocation0 [shape = 'u32[]', space=smem, size = 0x4, offset = 0x4, fixed_abs, tag = 'smem constant byte address 0x4 - core index']
  #allocation1 [shape = 'u32[72,128]{1,0:T(1,128)}', space=vmem, size = 0x9000, scoped, tag = 'internal scratch']
  %s0 = inlined_call_operand.vmem [shape: f32[32,64], index: 0, kind: input, shape index: {}]
  %s1 = inlined_call_operand.vmem [shape: f32[32,1], index: 1, kind: input, shape index: {}]
  %s2 = inlined_call_operand.hbm [shape: f32[2,32,256], index: 2, kind: input, shape index: {}]
  %s3 = inlined_call_operand.hbm [shape: f32[2,32,256], index: 3, kind: input, shape index: {}]
  %s4 = inlined_call_operand.hbm [shape: f32[2,32,256], index: 4, kind: output, shape index: {}]
  %s5 = sld [smem:[#allocation0]]
  $region57: #{tpu_custom_call.1} parent=0
    _
  %s7 = ssub.s32 1, %s5
  %s8 = scalar_select 0, %s7, %s5
  $region1: #{tpu_custom_call.1} parent=0
    #allocation2 [shape = 'u8[65536]{0}', space=vmem, size = 0x10000, scoped, tag = 'input window, operand 2']
    #allocation3 [shape = 's32[2]{0}', space=sflag, size = 0x8, scoped, tag = 'scoped memory for tpu_custom_call.1']
    #allocation4 [shape = 's32[2]{0}', space=sflag, size = 0x8, scoped, tag = 'scoped memory for tpu_custom_call.1']
    #allocation5 [shape = 'u8[65536]{0}', space=vmem, size = 0x10000, scoped, tag = 'input window, operand 3']
    #allocation6 [shape = 's32[2]{0}', space=sflag, size = 0x8, scoped, tag = 'scoped memory for tpu_custom_call.1']
    #allocation7 [shape = 'u8[65536]{0}', space=vmem, size = 0x10000, scoped, tag = 'output window, operand 0']
    %9 = vsyncpa [#allocation3], 0
    %s10 = scalar_lea.sflag [#allocation3], 1
    %11 = vsyncpa %s10, 0
    %12 = vsyncpa [#allocation6], 0
    %s13 = scalar_lea.sflag [#allocation6], 1
    %14 = vsyncpa %s13, 0
    %15 = vsyncpa [#allocation4], 0
    %s16 = scalar_lea.sflag [#allocation4], 1
    %17 = vsyncpa %s16, 0
    loop: start=0, step=1, limit=4
    $region2: #{tpu_custom_call.1} parent=1 // loop_pre_header
      _
    $region3: #{tpu_custom_call.1} parent=1 // loop_header
      %s19 = sphi 0, %s23
      %p20 = scmp.ge.s32.totalorder %s19, 4
      %s26 = sphi 0, %s38
      %s27 = sphi 0, %s34
      %s28 = sphi 0, %s26
      %s29 = sphi 0, %s27
      %s30 = sphi 0, %s28
      %s31 = sphi 0, %s29
      %s39 = sphi 0, %s39
      %s41 = sphi 0, %s39
      %s42 = sphi 0, %s41
      %s56 = sphi 0, %s42
      %s60 = sphi 0, %s60
      %s62 = sphi 0, %s60
      %s63 = sphi 0, %s62
      %s77 = sphi 0, %s63
      %s85 = sphi 0, %s87
      %s88 = sphi 0, %s85
      %s89 = sphi 0, %s88
      %s105 = sphi 0, %s89
      %s113 = sphi 0, %s115
      %s116 = sphi 0, %s113
      %s117 = sphi 0, %s116
      %s133 = sphi 0, %s117
      %s141 = sphi 0, %s143
      %s144 = sphi 0, %s141
      %s145 = sphi 0, %s144
      %s161 = sphi 0, %s145
    $region4: #{tpu_custom_call.1} parent=1 // loop_header_branch
      %22 = sbr.rel (%p20) target = $region8
    $region5: #{tpu_custom_call.1} parent=1 // loop_body
      %s24 = ssub.s32 %s19, 1
      %s25 = ssub.s32 %s19, 2
      %s32 = sadd.s32 1, %s27
      %p33 = scmp.ge.s32.totalorder %s32, 1
      %s34 = scalar_select %p33, 0, %s32
      %s35 = sadd.s32 1, %s26
      %s36 = scalar_select %p33, %s35, %s26
      %p37 = scmp.ge.s32.totalorder %s36, 2
      %s38 = scalar_select %p37, 0, %s36
      %s40 = sadd.s32 %s39, 1
      %p43 = scmp.eq.s32.totalorder %s19, 1
      %p44 = scmp.ne.s32.totalorder %s39, %s41
      %p45 = scmp.eq.s32.totalorder %s19, 0
      %p46 = por %p44, %p45
      %p47 = scmp.ne.s32.totalorder %s39, %s41
      %p48 = scmp.eq.s32.totalorder %s24, 1
      %p49 = por %p47, %p48
      %p50 = scmp.ne.s32.totalorder %s41, %s42
      %p51 = scmp.eq.s32.totalorder %s24, 0
      %p52 = por %p50, %p51
      %p53 = scmp.ne.s32.totalorder %s41, %s42
      %p54 = scmp.eq.s32.totalorder %s25, 1
      %p55 = por %p53, %p54
      %p57 = scmp.ne.s32.totalorder %s42, %s56
      %p58 = scmp.eq.s32.totalorder %s25, 0
      %p59 = por %p57, %p58
      %s61 = sadd.s32 %s60, 1
      %p64 = scmp.eq.s32.totalorder %s19, 1
      %p65 = scmp.ne.s32.totalorder %s60, %s62
      %p66 = scmp.eq.s32.totalorder %s19, 0
      %p67 = por %p65, %p66
      %p68 = scmp.ne.s32.totalorder %s60, %s62
      %p69 = scmp.eq.s32.totalorder %s24, 1
      %p70 = por %p68, %p69
      %p71 = scmp.ne.s32.totalorder %s62, %s63
      %p72 = scmp.eq.s32.totalorder %s24, 0
      %p73 = por %p71, %p72
      %p74 = scmp.ne.s32.totalorder %s62, %s63
      %p75 = scmp.eq.s32.totalorder %s25, 1
      %p76 = por %p74, %p75
      %p78 = scmp.ne.s32.totalorder %s63, %s77
      %p79 = scmp.eq.s32.totalorder %s25, 0
      %p80 = por %p78, %p79
      %s81 = ssub.s32 %s26, %s38
      %s82 = ssub.s32 %s27, %s34
      %s83 = sor.u32 %s81, %s82
      %p84 = scmp.eq.s32.totalorder %s83, 0
      %s86 = sadd.s32 %s85, 1
      %s87 = scalar_select %p84, %s85, %s86
      %p90 = pneg %p84
      %p91 = scmp.eq.s32.totalorder %s19, 1
      %p92 = por %p90, %p91
      %p93 = scmp.ne.s32.totalorder %s85, %s88
      %p94 = scmp.eq.s32.totalorder %s19, 0
      %p95 = por %p93, %p94
      %p96 = scmp.ne.s32.totalorder %s85, %s88
      %p97 = scmp.eq.s32.totalorder %s24, 1
      %p98 = por %p96, %p97
      %p99 = scmp.ne.s32.totalorder %s88, %s89
      %p100 = scmp.eq.s32.totalorder %s24, 0
      %p101 = por %p99, %p100
      %p102 = scmp.ne.s32.totalorder %s88, %s89
      %p103 = scmp.eq.s32.totalorder %s25, 1
      %p104 = por %p102, %p103
      %p106 = scmp.ne.s32.totalorder %s89, %s105
      %p107 = scmp.eq.s32.totalorder %s25, 0
      %p108 = por %p106, %p107
      %s109 = ssub.s32 %s26, %s38
      %s110 = ssub.s32 %s27, %s34
      %s111 = sor.u32 %s109, %s110
      %p112 = scmp.eq.s32.totalorder %s111, 0
      %s114 = sadd.s32 %s113, 1
      %s115 = scalar_select %p112, %s113, %s114
      %p118 = pneg %p112
      %p119 = scmp.eq.s32.totalorder %s19, 1
      %p120 = por %p118, %p119
      %p121 = scmp.ne.s32.totalorder %s113, %s116
      %p122 = scmp.eq.s32.totalorder %s19, 0
      %p123 = por %p121, %p122
      %p124 = scmp.ne.s32.totalorder %s113, %s116
      %p125 = scmp.eq.s32.totalorder %s24, 1
      %p126 = por %p124, %p125
      %p127 = scmp.ne.s32.totalorder %s116, %s117
      %p128 = scmp.eq.s32.totalorder %s24, 0
      %p129 = por %p127, %p128
      %p130 = scmp.ne.s32.totalorder %s116, %s117
      %p131 = scmp.eq.s32.totalorder %s25, 1
      %p132 = por %p130, %p131
      %p134 = scmp.ne.s32.totalorder %s117, %s133
      %p135 = scmp.eq.s32.totalorder %s25, 0
      %p136 = por %p134, %p135
      %s137 = ssub.s32 %s26, %s38
      %s138 = ssub.s32 %s27, %s34
      %s139 = sor.u32 %s137, %s138
      %p140 = scmp.eq.s32.totalorder %s139, 0
      %s142 = sadd.s32 %s141, 1
      %s143 = scalar_select %p140, %s141, %s142
      %p146 = pneg %p140
      %p147 = scmp.eq.s32.totalorder %s19, 1
      %p148 = por %p146, %p147
      %p149 = scmp.ne.s32.totalorder %s141, %s144
      %p150 = scmp.eq.s32.totalorder %s19, 0
      %p151 = por %p149, %p150
      %p152 = scmp.ne.s32.totalorder %s141, %s144
      %p153 = scmp.eq.s32.totalorder %s24, 1
      %p154 = por %p152, %p153
      %p155 = scmp.ne.s32.totalorder %s144, %s145
      %p156 = scmp.eq.s32.totalorder %s24, 0
      %p157 = por %p155, %p156
      %p158 = scmp.ne.s32.totalorder %s144, %s145
      %p159 = scmp.eq.s32.totalorder %s25, 1
      %p160 = por %p158, %p159
      %p162 = scmp.ne.s32.totalorder %s145, %s161
      %p163 = scmp.eq.s32.totalorder %s25, 0
      %p164 = por %p162, %p163
      %p165 = scmp.le.s32.totalorder 1, %s19
      %p166 = scmp.lt.s32.totalorder %s19, 3
      %p167 = pnand %p165, %p166
      %p168 = pneg %p167
      // Predicated region
      $region9: #{tpu_custom_call.1} parent=5 // pred_check
        _
      $region10: #{tpu_custom_call.1} parent=5 // pred_check_branch
        %170 = sbr.rel (%p167) target = $region12
      $region11: #{tpu_custom_call.1} parent=5 // pred_region
        %s171 = ssub.s32 %s19, 1
        // Predicated region
        $region13: #{tpu_custom_call.1} parent=11 // pred_check
          %p172 = pneg %p52
        $region14: #{tpu_custom_call.1} parent=11 // pred_check_branch
          %174 = sbr.rel (%p172) target = $region16
        $region15: #{tpu_custom_call.1} parent=11 // pred_region
          _
        $region16: #{tpu_custom_call.1} parent=11 // pred_fallthru
          _
        // Predicated region
        $region17: #{tpu_custom_call.1} parent=11 // pred_check
          %p175 = pneg %p73
        $region18: #{tpu_custom_call.1} parent=11 // pred_check_branch
          %177 = sbr.rel (%p175) target = $region20
        $region19: #{tpu_custom_call.1} parent=11 // pred_region
          _
        $region20: #{tpu_custom_call.1} parent=11 // pred_fallthru
          _
      $region12: #{tpu_custom_call.1} parent=5 // pred_fallthru
        _
      %p178 = scmp.lt.s32.totalorder %s19, 2
      // Predicated region
      $region21: #{tpu_custom_call.1} parent=5 // pred_check
        %p179 = pneg %p178
      $region22: #{tpu_custom_call.1} parent=5 // pred_check_branch
        %181 = sbr.rel (%p179) target = $region24
      $region23: #{tpu_custom_call.1} parent=5 // pred_region
        // Predicated region
        $region25: #{tpu_custom_call.1} parent=23 // pred_check
          %p182 = pneg %p95
        $region26: #{tpu_custom_call.1} parent=23 // pred_check_branch
          %184 = sbr.rel (%p182) target = $region28
        $region27: #{tpu_custom_call.1} parent=23 // pred_region
          %s185 = sand.u32 %s85, 1
          %s186 = scalar_lea.sflag [#allocation3], %s185
          %s187 = sand.u32 %s85, 1
          %s188 = smul.addr %s187, 64
          %s189 = scalar_lea.vmem [#allocation2], %s188
          %s190 = smul.u32 2, %s27
          %192 = vsyncadd %s186, 0
          %s193 = smul.addr %s26, 8
          %s194 = sadd.s32 %s190, %s193
          %s195 = smul.addr %s194, 8
          %s196 = scalar_lea.hbm %s2, %s195
          %s197 = sshll.u32 %s196, 4
          %s198 = int_to_ptr.hbm [resolvable:$true] %s197
          %s199 = sshll.u32 %s189, 4
          %s200 = int_to_ptr.vmem [resolvable:$true] %s199
          %205 = dma.hbm_to_vmem [thread:$0]  %s198, 1024, %s200, %s186, 256, 256, 16
        $region28: #{tpu_custom_call.1} parent=23 // pred_fallthru
          _
        // Predicated region
        $region29: #{tpu_custom_call.1} parent=23 // pred_check
          %p206 = pneg %p123
        $region30: #{tpu_custom_call.1} parent=23 // pred_check_branch
          %208 = sbr.rel (%p206) target = $region32
        $region31: #{tpu_custom_call.1} parent=23 // pred_region
          %s209 = sand.u32 %s113, 1
          %s210 = scalar_lea.sflag [#allocation6], %s209
          %s211 = sand.u32 %s113, 1
          %s212 = smul.addr %s211, 64
          %s213 = scalar_lea.vmem [#allocation5], %s212
          %s214 = smul.u32 2, %s27
          %216 = vsyncadd %s210, 0
          %s217 = smul.addr %s26, 8
          %s218 = sadd.s32 %s214, %s217
          %s219 = smul.addr %s218, 8
          %s220 = scalar_lea.hbm %s3, %s219
          %s221 = sshll.u32 %s220, 4
          %s222 = int_to_ptr.hbm [resolvable:$true] %s221
          %s223 = sshll.u32 %s213, 4
          %s224 = int_to_ptr.vmem [resolvable:$true] %s223
          %229 = dma.hbm_to_vmem [thread:$0]  %s222, 1024, %s224, %s210, 256, 256, 16
        $region32: #{tpu_custom_call.1} parent=23 // pred_fallthru
          _
      $region24: #{tpu_custom_call.1} parent=5 // pred_fallthru
        _
      %p230 = scmp.le.s32.totalorder 1, %s19
      %p231 = scmp.lt.s32.totalorder %s19, 3
      %p232 = pnand %p230, %p231
      %p233 = pneg %p232
      // Predicated region
      $region33: #{tpu_custom_call.1} parent=5 // pred_check
        _
      $region34: #{tpu_custom_call.1} parent=5 // pred_check_branch
        %235 = sbr.rel (%p232) target = $region36
      $region35: #{tpu_custom_call.1} parent=5 // pred_region
        %s236 = ssub.s32 %s19, 1
        %s237 = sand.u32 %s88, 1
        %s238 = scalar_lea.sflag [#allocation3], %s237
        %s239 = sand.u32 %s88, 1
        %s240 = smul.addr %s239, 64
        %s241 = scalar_lea.vmem [#allocation2], %s240
        // Predicated region
        $region37: #{tpu_custom_call.1} parent=35 // pred_check
          %p242 = pneg %p101
        $region38: #{tpu_custom_call.1} parent=35 // pred_check_branch
          %244 = sbr.rel (%p242) target = $region40
        $region39: #{tpu_custom_call.1} parent=35 // pred_region
          %246 = dma.done %s238, 1024
        $region40: #{tpu_custom_call.1} parent=35 // pred_fallthru
          _
        %s247 = sand.u32 %s116, 1
        %s248 = scalar_lea.sflag [#allocation6], %s247
        %s249 = sand.u32 %s116, 1
        %s250 = smul.addr %s249, 64
        %s251 = scalar_lea.vmem [#allocation5], %s250
        // Predicated region
        $region41: #{tpu_custom_call.1} parent=35 // pred_check
          %p252 = pneg %p129
        $region42: #{tpu_custom_call.1} parent=35 // pred_check_branch
          %254 = sbr.rel (%p252) target = $region44
        $region43: #{tpu_custom_call.1} parent=35 // pred_region
          %256 = dma.done %s248, 1024
        $region44: #{tpu_custom_call.1} parent=35 // pred_fallthru
          _
        %p257 = pneg %p52
        %p258 = pneg %p49
        %p259 = pneg %p73
        %p260 = pneg %p70
        %s261 = sand.u32 %s88, 1
        %s262 = scalar_lea.sflag [#allocation3], %s261
        %s263 = sand.u32 %s88, 1
        %s264 = smul.addr %s263, 64
        %s265 = scalar_lea.vmem [#allocation2], %s264
        %p266 = pneg %p101
        %p267 = pneg %p98
        %s268 = sand.u32 %s116, 1
        %s269 = scalar_lea.sflag [#allocation6], %s268
        %s270 = sand.u32 %s116, 1
        %s271 = smul.addr %s270, 64
        %s272 = scalar_lea.vmem [#allocation5], %s271
        %p273 = pneg %p129
        %p274 = pneg %p126
        %p275 = pneg %p157
        %p276 = pneg %p154
        %s277 = sand.u32 %s144, 1
        %s278 = scalar_lea.sflag [#allocation4], %s277
        %s279 = sand.u32 %s144, 1
        %s280 = smul.addr %s279, 64
        %s281 = scalar_lea.vmem [#allocation7], %s280
        %s282 = smul.u32 2, %s29
        %s283 = smul.u32 2, %s29
        %s284 = smul.u32 2, %s29
        %v285 = vld [vmem:[%s0] sm:$0xff]
        %v286 = vld [vmem:[%s0 + $0x8] sm:$0xff]
        %v287 = vld [vmem:[%s0 + $0x10] sm:$0xff]
        %v288 = vld [vmem:[%s0 + $0x18] sm:$0xff]
        %v289 = vld [vmem:[%s1] sm:$0xff]
        %v290 = vld [vmem:[%s1 + $0x8] sm:$0xff]
        %v291 = vld [vmem:[%s1 + $0x10] sm:$0xff]
        %v292 = vld [vmem:[%s1 + $0x18] sm:$0xff]
        %v293 = vld [vmem:[%s251] sm:$0xff]
        %v294 = vld [vmem:[%s251 + $0x8] sm:$0xff]
        %v295 = vld [vmem:[%s251 + $0x10] sm:$0xff]
        %v296 = vld [vmem:[%s251 + $0x18] sm:$0xff]
        %v297 = vld [vmem:[%s251 + $0x20] sm:$0xff]
        %v298 = vld [vmem:[%s251 + $0x28] sm:$0xff]
        %v299 = vld [vmem:[%s251 + $0x30] sm:$0xff]
        %v300 = vld [vmem:[%s251 + $0x38] sm:$0xff]
        %v301 = vand.u32 2147483647, %v293
        %v302 = vand.u32 2147483647, %v294
        %v303 = vand.u32 2147483647, %v295
        %v304 = vand.u32 2147483647, %v296
        %v305 = vand.u32 2147483647, %v297
        %v306 = vand.u32 2147483647, %v298
        %v307 = vand.u32 2147483647, %v299
        %v308 = vand.u32 2147483647, %v300
        %v309 = vsub.f32 0.0, %v301
        %v310 = vsub.f32 0.0, %v302
        %v311 = vsub.f32 0.0, %v303
        %v312 = vsub.f32 0.0, %v304
        %v313 = vsub.f32 0.0, %v305
        %v314 = vsub.f32 0.0, %v306
        %v315 = vsub.f32 0.0, %v307
        %v316 = vsub.f32 0.0, %v308
        %v317 = vmul.f32 %v309, 1.442695
        %v318 = vpow.pop %v317
        %v319 = vmul.f32 %v310, 1.442695
        %v320 = vpow.pop %v319
        %v321 = vmul.f32 %v311, 1.442695
        %v322 = vpow.pop %v321
        %v323 = vmul.f32 %v312, 1.442695
        %v324 = vpow.pop %v323
        %v325 = vmul.f32 %v313, 1.442695
        %v326 = vpow.pop %v325
        %v327 = vmul.f32 %v314, 1.442695
        %v328 = vpow.pop %v327
        %v329 = vmul.f32 %v315, 1.442695
        %v330 = vpow.pop %v329
        %v331 = vmul.f32 %v316, 1.442695
        %v332 = vpow.pop %v331
        %v333 = vsub.f32 %v318, 1.0
        %v334 = vsub.f32 %v320, 1.0
        %v335 = vsub.f32 %v322, 1.0
        %v336 = vsub.f32 %v324, 1.0
        %v337 = vsub.f32 %v326, 1.0
        %v338 = vsub.f32 %v328, 1.0
        %v339 = vsub.f32 %v330, 1.0
        %v340 = vsub.f32 %v332, 1.0
        %vm341 = vcmp.gt.f32.partialorder %v293, 0.0
        %vm342 = vcmp.gt.f32.partialorder %v294, 0.0
        %vm343 = vcmp.gt.f32.partialorder %v295, 0.0
        %vm344 = vcmp.gt.f32.partialorder %v296, 0.0
        %vm345 = vcmp.gt.f32.partialorder %v297, 0.0
        %vm346 = vcmp.gt.f32.partialorder %v298, 0.0
        %vm347 = vcmp.gt.f32.partialorder %v299, 0.0
        %vm348 = vcmp.gt.f32.partialorder %v300, 0.0
        %v349 = vsel %vm341, %v293, %v333
        %v350 = vsel %vm342, %v294, %v334
        %v351 = vsel %vm343, %v295, %v335
        %v352 = vsel %vm344, %v296, %v336
        %v353 = vsel %vm345, %v297, %v337
        %v354 = vsel %vm346, %v298, %v338
        %v355 = vsel %vm347, %v299, %v339
        %v356 = vsel %vm348, %v300, %v340
        %v357 = vsub.f32 0.0, %v293
        %v358 = vsub.f32 0.0, %v294
        %v359 = vsub.f32 0.0, %v295
        %v360 = vsub.f32 0.0, %v296
        %v361 = vsub.f32 0.0, %v297
        %v362 = vsub.f32 0.0, %v298
        %v363 = vsub.f32 0.0, %v299
        %v364 = vsub.f32 0.0, %v300
        %v365 = vsel %vm341, %v333, %v357
        %v366 = vsel %vm342, %v334, %v358
        %v367 = vsel %vm343, %v335, %v359
        %v368 = vsel %vm344, %v336, %v360
        %v369 = vsel %vm345, %v337, %v361
        %v370 = vsel %vm346, %v338, %v362
        %v371 = vsel %vm347, %v339, %v363
        %v372 = vsel %vm348, %v340, %v364
        %374 = vset.pattern.permute.xlu0 0
        %375 = vperm.xlu0 %374, %v289
        %v376 = vpop.permute.xlu0 %375
        %379 = vset.pattern.permute.xlu0 0
        %380 = vperm.xlu0 %379, %v290
        %v381 = vpop.permute.xlu0 %380
        %384 = vset.pattern.permute.xlu0 0
        %385 = vperm.xlu0 %384, %v291
        %v386 = vpop.permute.xlu0 %385
        %389 = vset.pattern.permute.xlu0 0
        %390 = vperm.xlu0 %389, %v292
        %v391 = vpop.permute.xlu0 %390
        %vm393 = vcmask 523264
        %v395 = vsel %vm393, %v285, 0
        %v398 = vsel %vm393, %v286, 0
        %v401 = vsel %vm393, %v287, 0
        %v404 = vsel %vm393, %v288, 0
        %406 = vmatpush.msra.mxu0 0.0
        %407 = vmatpush.msra.mxu0 0.0
        %408 = vmatpush.msra.mxu0 0.0
        %409 = vmatpush.msra.mxu0 0.0
        %410 = vmatpush.msra.mxu0 0.0
        %411 = vmatpush.msra.mxu0 0.0
        %412 = vmatpush.msra.mxu0 0.0
        %413 = vmatpush.msra.mxu0 0.0
        %414 = vmatpush.msra.mxu0 %v371
        %415 = vmatpush.msra.mxu0 %v369
        %416 = vmatpush.msra.mxu0 %v367
        %417 = vmatpush.msra.mxu0 %v365
        %418 = vmatpush.msra.mxu0 %v355
        %419 = vmatpush.msra.mxu0 %v353
        %420 = vmatpush.msra.mxu0 %v351
        %421 = vmatpush.msra.mxu0 %v349
        %422 = vmatmul.f32.gmra.mxu0 %v395
        %v423 = vpop.f32.mrf.mxu0
        %v424 = vadd.f32 %v376, %v423
        %425 = vmatmul.f32.gmra.mxu0 %v398
        %v426 = vpop.f32.mrf.mxu0
        %v427 = vadd.f32 %v381, %v426
        %428 = vmatmul.f32.gmra.mxu0 %v401
        %v429 = vpop.f32.mrf.mxu0
        %v430 = vadd.f32 %v386, %v429
        %431 = vmatmul.f32.gmra.mxu0 %v404
        %v432 = vpop.f32.mrf.mxu0
        %v433 = vadd.f32 %v391, %v432
        %434 = vdwg.mxu0
        %435 = vmatpush.msra.mxu0 0.0
        %436 = vmatpush.msra.mxu0 0.0
        %437 = vmatpush.msra.mxu0 0.0
        %438 = vmatpush.msra.mxu0 0.0
        %439 = vmatpush.msra.mxu0 0.0
        %440 = vmatpush.msra.mxu0 0.0
        %441 = vmatpush.msra.mxu0 0.0
        %442 = vmatpush.msra.mxu0 0.0
        %443 = vmatpush.msra.mxu0 %v372
        %444 = vmatpush.msra.mxu0 %v370
        %445 = vmatpush.msra.mxu0 %v368
        %446 = vmatpush.msra.mxu0 %v366
        %447 = vmatpush.msra.mxu0 %v356
        %448 = vmatpush.msra.mxu0 %v354
        %449 = vmatpush.msra.mxu0 %v352
        %450 = vmatpush.msra.mxu0 %v350
        %451 = vmatmul.f32.gmra.mxu0 %v395
        %v452 = vpop.f32.mrf.mxu0
        %v453 = vadd.f32 %v376, %v452
        %454 = vmatmul.f32.gmra.mxu0 %v398
        %v455 = vpop.f32.mrf.mxu0
        %v456 = vadd.f32 %v381, %v455
        %457 = vmatmul.f32.gmra.mxu0 %v401
        %v458 = vpop.f32.mrf.mxu0
        %v459 = vadd.f32 %v386, %v458
        %460 = vmatmul.f32.gmra.mxu0 %v404
        %v461 = vpop.f32.mrf.mxu0
        %v462 = vadd.f32 %v391, %v461
        %463 = vdwg.mxu0
        %v464 = vld [vmem:[%s241] sm:$0xff]
        %v465 = vld [vmem:[%s241 + $0x8] sm:$0xff]
        %v466 = vld [vmem:[%s241 + $0x10] sm:$0xff]
        %v467 = vld [vmem:[%s241 + $0x18] sm:$0xff]
        %v468 = vld [vmem:[%s241 + $0x20] sm:$0xff]
        %v469 = vld [vmem:[%s241 + $0x28] sm:$0xff]
        %v470 = vld [vmem:[%s241 + $0x30] sm:$0xff]
        %v471 = vld [vmem:[%s241 + $0x38] sm:$0xff]
        %v472 = vadd.f32 %v424, %v464
        %v473 = vadd.f32 %v453, %v465
        %v474 = vadd.f32 %v427, %v466
        %v475 = vadd.f32 %v456, %v467
        %v476 = vadd.f32 %v430, %v468
        %v477 = vadd.f32 %v459, %v469
        %v478 = vadd.f32 %v433, %v470
        %v479 = vadd.f32 %v462, %v471
        %480 = vst [vmem:[%s281] sm:$0xff] %v472
        %481 = vst [vmem:[%s281 + $0x8] sm:$0xff] %v473
        %482 = vst [vmem:[%s281 + $0x10] sm:$0xff] %v474
        %483 = vst [vmem:[%s281 + $0x18] sm:$0xff] %v475
        %484 = vst [vmem:[%s281 + $0x20] sm:$0xff] %v476
        %485 = vst [vmem:[%s281 + $0x28] sm:$0xff] %v477
        %486 = vst [vmem:[%s281 + $0x30] sm:$0xff] %v478
        %487 = vst [vmem:[%s281 + $0x38] sm:$0xff] %v479
        %s488 = sand.u32 %s144, 1
        %s489 = scalar_lea.sflag [#allocation4], %s488
        %s490 = sand.u32 %s144, 1
        %s491 = smul.addr %s490, 64
        %s492 = scalar_lea.vmem [#allocation7], %s491
        // Predicated region
        $region45: #{tpu_custom_call.1} parent=35 // pred_check
          %p493 = pneg %p154
        $region46: #{tpu_custom_call.1} parent=35 // pred_check_branch
          %495 = sbr.rel (%p493) target = $region48
        $region47: #{tpu_custom_call.1} parent=35 // pred_region
          %s496 = smul.u32 2, %s29
          %498 = vsyncadd %s489, 0
          %s499 = smul.addr %s28, 8
          %s500 = sadd.s32 %s496, %s499
          %s501 = smul.addr %s500, 8
          %s502 = scalar_lea.hbm %s4, %s501
          %s503 = sshll.u32 %s492, 4
          %s504 = int_to_ptr.vmem [resolvable:$true] %s503
          %s505 = sshll.u32 %s502, 4
          %s506 = int_to_ptr.hbm [resolvable:$true] %s505
          %511 = dma.vmem_to_hbm [thread:$0]  %s504, 1024, %s506, %s489, 256, 256, 16
        $region48: #{tpu_custom_call.1} parent=35 // pred_fallthru
          _
      $region36: #{tpu_custom_call.1} parent=5 // pred_fallthru
        _
      %p512 = scmp.le.s32.totalorder 2, %s19
      // Predicated region
      $region49: #{tpu_custom_call.1} parent=5 // pred_check
        %p513 = pneg %p512
      $region50: #{tpu_custom_call.1} parent=5 // pred_check_branch
        %515 = sbr.rel (%p513) target = $region52
      $region51: #{tpu_custom_call.1} parent=5 // pred_region
        %s516 = ssub.s32 %s19, 2
        // Predicated region
        $region53: #{tpu_custom_call.1} parent=51 // pred_check
          %p517 = pneg %p160
        $region54: #{tpu_custom_call.1} parent=51 // pred_check_branch
          %519 = sbr.rel (%p517) target = $region56
        $region55: #{tpu_custom_call.1} parent=51 // pred_region
          %s520 = sand.u32 %s145, 1
          %s521 = scalar_lea.sflag [#allocation4], %s520
          %s522 = sand.u32 %s145, 1
          %s523 = smul.addr %s522, 64
          %s524 = scalar_lea.vmem [#allocation7], %s523
          %526 = dma.done %s521, 1024
        $region56: #{tpu_custom_call.1} parent=51 // pred_fallthru
          _
      $region52: #{tpu_custom_call.1} parent=5 // pred_fallthru
        _
    $region6: #{tpu_custom_call.1} parent=1 // loop_footer
      %s23 = sadd.s32 1, %s19
    $region7: #{tpu_custom_call.1} parent=1 // loop_footer_branch
      %18 = sbr.rel target = $region3
    $region8: #{tpu_custom_call.1} parent=1 // loop_exit
      _
    %527 = vsyncpa [#allocation3], 1
    %s528 = scalar_lea.sflag [#allocation3], 1
    %529 = vsyncpa %s528, 1
    %530 = vsyncpa [#allocation6], 1
    %s531 = scalar_lea.sflag [#allocation6], 1
    %532 = vsyncpa %s531, 1
    %533 = vsyncpa [#allocation4], 1
    %s534 = scalar_lea.sflag [#allocation4], 1
    %535 = vsyncpa %s534, 1

</llo_original>
